<compile_context>
chip_gen: v6e
topology: v6e:2x2x1
jax: 0.10.0
libtpu: 0.0.40
codegen_flags: <defaults>
</compile_context>

<pallas_src>
import jax
import jax.numpy as jnp
from jax.experimental import pallas as pl
from jax.experimental.pallas import tpu as pltpu


def value_net_kernel(x_ref, w2_ref, b2_ref, wv_ref, bv_ref, out_ref):
    # value = relu(fc2(state)): cast the f32 state tile to bf16 on the VPU,
    # bf16 x bf16 matmul on the MXU with f32 accumulation.
    x = x_ref[...].astype(jnp.bfloat16)                          # (TB, D)
    h2 = jnp.dot(x, w2_ref[...],
                 preferred_element_type=jnp.float32) + b2_ref[...]
    h2 = jnp.maximum(h2, 0.0)                                    # f32, VPU

    # value = v(value): N=1 projection as VPU multiply + XLU lane reduction
    # (avoids a 1-lane MXU matmul); wv is f32 for full output precision.
    v = jnp.sum(h2 * wv_ref[...], axis=-1)                       # (TB,) f32

    # Lane-dense store: present the result as a (1, TB) row (dense vst).
    out_ref[...] = (v.reshape(1, -1) + bv_ref[...]).astype(out_ref.dtype)


def prepare_params(params):
    """One-time conversion of module params into kernel layout/dtype.

    Call once (at init / after each optimizer step), NOT per forward, so the
    per-call convert/reshape kernels disappear and the pallas_call is the
    only dispatch per forward. w1/b1 are dropped: their output is dead in the
    reference forward (which silently requires input_dims == fc1_dims).
    """
    _w1, _b1, w2, b2, wv, bv = params
    _d_in, f2 = w2.shape
    return {
        "w2": w2.astype(jnp.bfloat16),                 # (D, F2) bf16 MXU operand
        "b2": b2.reshape(1, f2).astype(jnp.float32),   # (1, F2) f32
        "wv": wv.reshape(1, f2).astype(jnp.float32),   # (1, F2) f32 lane-major row
        "bv": bv.reshape(1, 1).astype(jnp.float32),    # (1, 1)  f32
    }


def value_network_forward(state, prepared, block_b=512):
    """state: (B, D) float32; prepared: output of prepare_params(). Returns (B, 1) f32."""
    B, D = state.shape
    w2, b2, wv, bv = prepared["w2"], prepared["b2"], prepared["wv"], prepared["bv"]
    F2 = w2.shape[1]

    # Batch tile: one tile for small batches (no padding, no remainder); else a
    # multiple of 128 (satisfies the (8,128)/lane rules for both the f32 input
    # block and the lane-dense output block). The default 512 is a multiple of
    # 256 so each MXU pass is full on v6e/v7x. Pallas masks the partial last
    # block, so no jnp.pad of the batch is needed.
    if B <= block_b:
        TB = B
    else:
        TB = max(128, (block_b // 128) * 128)
    grid = pl.cdiv(B, TB)

    # Explicit VMEM budget (double-buffered x/out tiles + invariant weights),
    # with 2x headroom, capped well under v7x's 64 MiB per-core VMEM.
    vmem_bytes = (2 * TB * D * 4            # x tile, f32, double-buffered
                  + 2 * D * F2 * 2          # w2 bf16 (grid-invariant, 2 bufs)
                  + 4 * F2 * 4 + 2 * 4      # b2 + wv + bv, f32
                  + 2 * TB * 4)             # (1, TB) f32 output, double-buffered
    vmem_limit = int(min(max(2 * vmem_bytes, 4 << 20), 48 << 20))

    out_row = pl.pallas_call(
        value_net_kernel,
        out_shape=jax.ShapeDtypeStruct((1, B), jnp.float32),
        grid=(grid,),
        in_specs=[
            pl.BlockSpec((TB, D), lambda i: (i, 0)),   # state tile (f32; cast in-kernel)
            pl.BlockSpec((D, F2), lambda i: (0, 0)),   # fc2 weight (bf16, grid-invariant)
            pl.BlockSpec((1, F2), lambda i: (0, 0)),   # fc2 bias (f32)
            pl.BlockSpec((1, F2), lambda i: (0, 0)),   # v weight row (f32)
            pl.BlockSpec((1, 1),  lambda i: (0, 0)),   # v bias (f32)
        ],
        out_specs=pl.BlockSpec((1, TB), lambda i: (0, i)),   # lane-dense output rows
        compiler_params=pltpu.CompilerParams(
            dimension_semantics=("parallel",),
            vmem_limit_bytes=vmem_limit),
    )(state, w2, b2, wv, bv)

    # (1, B) -> (B, 1) preserves element order: a free bitcast, fused under jit.
    return out_row.reshape(B, 1)


def init_params(key, input_dim, fc1_dims, fc2_dims):
    """Deterministic init mimicking nn.Linear's U(-1/sqrt(fan_in), +1/sqrt(fan_in))."""
    ks = jax.random.split(key, 6)

    def uniform(k, shape, fan_in):
        bound = 1.0 / jnp.sqrt(jnp.float32(fan_in))
        return jax.random.uniform(k, shape, jnp.float32, -bound, bound)

    w1 = uniform(ks[0], (input_dim, fc1_dims), input_dim)   # (in, out)
    b1 = uniform(ks[1], (1, fc1_dims), input_dim)
    w2 = uniform(ks[2], (fc1_dims, fc2_dims), fc1_dims)
    b2 = uniform(ks[3], (1, fc2_dims), fc1_dims)
    wv = uniform(ks[4], (fc2_dims, 1), fc2_dims)
    bv = uniform(ks[5], (1, 1), fc2_dims)
    return (w1, b1, w2, b2, wv, bv)


def reference_forward_f32(state, params):
    """Pure-JAX f32 reference reproducing the PyTorch forward exactly."""
    w1, b1, w2, b2, wv, bv = params
    _value = jnp.maximum(state @ w1 + b1, 0.0)   # discarded, as in PyTorch
    value = jnp.maximum(state @ w2 + b2, 0.0)
    value = value @ wv + bv
    return value


def reference_forward_kernel_precision(state, params):
    """Same dataflow at the kernel's precision (bf16 matmul inputs, f32 accumulate)."""
    _w1, _b1, w2, b2, wv, bv = params
    h2 = jnp.dot(state.astype(jnp.bfloat16), w2.astype(jnp.bfloat16),
                 preferred_element_type=jnp.float32) + b2.reshape(1, -1)
    h2 = jnp.maximum(h2, 0.0)
    return jnp.sum(h2 * wv.reshape(1, -1).astype(jnp.float32),
                   axis=-1, keepdims=True) + bv.reshape(1, 1)


if __name__ == "__main__":
    # Small shapes consistent with the module: input_dims must equal fc1_dims
    # for the original forward() to be shape-valid (fc2 is applied to `state`).
    batch = 8
    input_dim = 32
    fc1_dims = 32   # == input_dim (required by fc2(state) in the reference)
    fc2_dims = 32

    key = jax.random.PRNGKey(0)
    k_params, k_state, k_state2 = jax.random.split(key, 3)
    params = init_params(k_params, input_dim, fc1_dims, fc2_dims)
    prepared = prepare_params(params)          # one-time weight prep (hoisted)

    fwd = jax.jit(value_network_forward, static_argnames=("block_b",))

    state = jax.random.normal(k_state, (batch, input_dim), jnp.float32)
    out = jax.block_until_ready(fwd(state, prepared))
    assert out.shape == (batch, 1), out.shape

    # Tight check vs. a reference at the kernel's precision.
    ref_kp = reference_forward_kernel_precision(state, params)
    assert jnp.allclose(out, ref_kp, atol=1e-3, rtol=1e-3), \
        "mismatch vs same-precision reference"

    # Loose check vs. the full-f32 PyTorch-equivalent forward (bf16 rounding).
    ref_f32 = reference_forward_f32(state, params)
    assert jnp.allclose(out, ref_f32, atol=5e-2, rtol=5e-2), \
        "mismatch vs f32 reference"

    # Exercise the multi-tile + partial-last-block path (no padding is used).
    big_b = 300
    state_big = jax.random.normal(k_state2, (big_b, input_dim), jnp.float32)
    out_big = jax.block_until_ready(fwd(state_big, prepared, block_b=128))
    assert out_big.shape == (big_b, 1), out_big.shape
    ref_big = reference_forward_kernel_precision(state_big, params)
    assert jnp.allclose(out_big, ref_big, atol=1e-3, rtol=1e-3), \
        "mismatch on multi-tile batch"

    print("KERNEL_OK")
</pallas_src>

<mosaic_0001>
module attributes {stable_mosaic.version = 11 : i64} {
  func.func @value_net_kernel(%arg0: i32, %arg1: memref<8x32xf32, #tpu.memory_space<vmem>>, %arg2: memref<32x32xbf16, #tpu.memory_space<vmem>>, %arg3: memref<1x32xf32, #tpu.memory_space<vmem>>, %arg4: memref<1x32xf32, #tpu.memory_space<vmem>>, %arg5: memref<1x1xf32, #tpu.memory_space<vmem>>, %arg6: memref<1x8xf32, #tpu.memory_space<vmem>>) attributes {dimension_semantics = [#tpu.dimension_semantics<parallel>], iteration_bounds = array<i64: 1>, scalar_prefetch = 0 : i64, scratch_operands = 0 : i64, tpu.core_type = #tpu.core_type<tc>, window_params = [{transform_indices = @transform_0, window_bounds = array<i64: 8, 32>}, {pipeline_mode = #tpu.pipeline_mode<synchronous>, transform_indices = @transform_1, window_bounds = array<i64: 32, 32>}, {pipeline_mode = #tpu.pipeline_mode<synchronous>, transform_indices = @transform_2, window_bounds = array<i64: 1, 32>}, {pipeline_mode = #tpu.pipeline_mode<synchronous>, transform_indices = @transform_3, window_bounds = array<i64: 1, 32>}, {pipeline_mode = #tpu.pipeline_mode<synchronous>, transform_indices = @transform_4, window_bounds = array<i64: 1, 1>}, {transform_indices = @transform_5, window_bounds = array<i64: 1, 8>}]} {
    %c0 = arith.constant 0 : index
    %c0_0 = arith.constant 0 : index
    %0 = vector.load %arg1[%c0, %c0_0] : memref<8x32xf32, #tpu.memory_space<vmem>>, vector<8x32xf32>
    %1 = arith.truncf %0 : vector<8x32xf32> to vector<8x32xbf16>
    %c0_1 = arith.constant 0 : index
    %c0_2 = arith.constant 0 : index
    %2 = vector.load %arg2[%c0_1, %c0_2] : memref<32x32xbf16, #tpu.memory_space<vmem>>, vector<32x32xbf16>
    %cst = arith.constant dense<0.000000e+00> : vector<8x32xf32>
    %3 = tpu.matmul %1, %2, %cst {dimension_numbers = #tpu.dot_dimension_numbers<[1], [0], [0], [1], [0, 0, 1, 1], [], []>} : vector<8x32xbf16>, vector<32x32xbf16>, vector<8x32xf32> -> vector<8x32xf32>
    %c0_3 = arith.constant 0 : index
    %c0_4 = arith.constant 0 : index
    %4 = vector.load %arg3[%c0_3, %c0_4] : memref<1x32xf32, #tpu.memory_space<vmem>>, vector<1x32xf32>
    %5 = vector.broadcast %4 : vector<1x32xf32> to vector<8x32xf32>
    %6 = arith.addf %3, %5 : vector<8x32xf32>
    %cst_5 = arith.constant 0.000000e+00 : f32
    %7 = vector.broadcast %cst_5 : f32 to vector<8x32xf32>
    %8 = arith.maximumf %6, %7 : vector<8x32xf32>
    %c0_6 = arith.constant 0 : index
    %c0_7 = arith.constant 0 : index
    %9 = vector.load %arg4[%c0_6, %c0_7] : memref<1x32xf32, #tpu.memory_space<vmem>>, vector<1x32xf32>
    %10 = vector.broadcast %9 : vector<1x32xf32> to vector<8x32xf32>
    %11 = arith.mulf %8, %10 : vector<8x32xf32>
    %cst_8 = arith.constant dense<0.000000e+00> : vector<8xf32>
    %12 = vector.multi_reduction <add>, %11, %cst_8 [1] : vector<8x32xf32> to vector<8xf32>
    %13 = vector.shape_cast %12 : vector<8xf32> to vector<1x8xf32>
    %c0_9 = arith.constant 0 : index
    %c0_10 = arith.constant 0 : index
    %14 = vector.load %arg5[%c0_9, %c0_10] : memref<1x1xf32, #tpu.memory_space<vmem>>, vector<1x1xf32>
    %15 = vector.broadcast %14 : vector<1x1xf32> to vector<1x8xf32>
    %16 = arith.addf %13, %15 : vector<1x8xf32>
    %c0_11 = arith.constant 0 : index
    %c0_12 = arith.constant 0 : index
    %17 = vector.load %arg6[%c0_11, %c0_12] : memref<1x8xf32, #tpu.memory_space<vmem>>, vector<1x8xf32>
    tpu.vector_store %arg6[%c0_11, %c0_12], %16 {strides = array<i32>} : memref<1x8xf32, #tpu.memory_space<vmem>>, vector<1x8xf32>,
    return
  }
  func.func @transform_0(%arg0: i32) -> (i32, i32) {
    %c0_i32 = arith.constant 0 : i32
    %c0_i32_0 = arith.constant 0 : i32
    return %arg0, %c0_i32 : i32, i32
  }
  func.func @transform_1(%arg0: i32) -> (i32, i32) {
    %c0_i32 = arith.constant 0 : i32
    %c0_i32_0 = arith.constant 0 : i32
    %c0_i32_1 = arith.constant 0 : i32
    return %c0_i32, %c0_i32_0 : i32, i32
  }
  func.func @transform_2(%arg0: i32) -> (i32, i32) {
    %c0_i32 = arith.constant 0 : i32
    %c0_i32_0 = arith.constant 0 : i32
    %c0_i32_1 = arith.constant 0 : i32
    return %c0_i32, %c0_i32_0 : i32, i32
  }
  func.func @transform_3(%arg0: i32) -> (i32, i32) {
    %c0_i32 = arith.constant 0 : i32
    %c0_i32_0 = arith.constant 0 : i32
    %c0_i32_1 = arith.constant 0 : i32
    return %c0_i32, %c0_i32_0 : i32, i32
  }
  func.func @transform_4(%arg0: i32) -> (i32, i32) {
    %c0_i32 = arith.constant 0 : i32
    %c0_i32_0 = arith.constant 0 : i32
    %c0_i32_1 = arith.constant 0 : i32
    return %c0_i32, %c0_i32_0 : i32, i32
  }
  func.func @transform_5(%arg0: i32) -> (i32, i32) {
    %c0_i32 = arith.constant 0 : i32
    %c0_i32_0 = arith.constant 0 : i32
    return %c0_i32, %arg0 : i32, i32
  }
}

</mosaic_0001>

<llo_original>
// kernel: value_network_forward.1
$region0: #{value_network_forward.1}
  #allocation0 [shape = 'u32[]', space=smem, size = 0x4, offset = 0x4, fixed_abs, tag = 'smem constant byte address 0x4 - core index']
  #allocation1 [shape = 'u32[144,128]{1,0:T(1,128)}', space=vmem, size = 0x12000, scoped, tag = 'internal scratch']
  #allocation2 [shape = 'f32[1,1]{1,0:T(1,128)S(1)}', space=vmem, size = 0x200, scoped, tag = 'scoped memory for value_network_forward.1']
  %s0 = inlined_call_operand.hbm [shape: f32[8,32], index: 0, kind: input, shape index: {}]
  %s1 = inlined_call_operand.hbm [shape: bf16[32,32], index: 1, kind: input, shape index: {}]
  %s2 = inlined_call_operand.vmem [shape: f32[1,32], index: 2, kind: input, shape index: {}]
  %s3 = inlined_call_operand.vmem [shape: f32[1,32], index: 3, kind: input, shape index: {}]
  %s4 = inlined_call_operand.<no memory space> [shape: f32[1,1], index: 4, kind: input, shape index: {}]
  %s5 = inlined_call_operand.hbm [shape: f32[1,8], index: 5, kind: output, shape index: {}]
  %s6 = sld [smem:[#allocation0]]
  $region38: #{value_network_forward.1} parent=0
    _
  %s8 = ssub.s32 1, %s6
  %s9 = scalar_select 0, %s8, %s6
  %v10 = vstv %s4
  %11 = vst [vmem:[#allocation2] sm:$0x1] %v10
  $region1: #{value_network_forward.1} parent=0
    #allocation3 [shape = 'u8[4096]{0}', space=vmem, size = 0x1000, scoped, tag = 'input window, operand 0, single buffered']
    #allocation4 [shape = 's32[1]{0}', space=sflag, size = 0x4, scoped, tag = 'scoped memory for value_network_forward.1']
    #allocation5 [shape = 's32[1]{0}', space=sflag, size = 0x4, scoped, tag = 'scoped memory for value_network_forward.1']
    #allocation6 [shape = 'u8[8192]{0}', space=vmem, size = 0x2000, scoped, tag = 'input window, operand 1, single buffered']
    #allocation7 [shape = 's32[1]{0}', space=sflag, size = 0x4, scoped, tag = 'scoped memory for value_network_forward.1']
    #allocation8 [shape = 'u8[512]{0}', space=vmem, size = 0x400, scoped, tag = 'output window, operand 0, single buffered']
    %12 = vsyncpa [#allocation4], 0
    %13 = vsyncpa [#allocation7], 0
    %14 = vsyncpa [#allocation5], 0
    // Predicated region
    $region2: #{value_network_forward.1} parent=1 // pred_check
      _
    $region3: #{value_network_forward.1} parent=1 // pred_check_branch
      %16 = sbr.rel (0) target = $region5
    $region4: #{value_network_forward.1} parent=1 // pred_region
      %s18 = ssub.s32 128, 128
      %19 = vsyncadd [#allocation4], %s18
      %s21 = sshll.u32 [#allocation3], 4
      %s22 = int_to_ptr.vmem [resolvable:$true] %s21
      %24 = dma.hbm_to_vmem [thread:$0]  %s0, 128, %s22, [#allocation4]
    $region5: #{value_network_forward.1} parent=1 // pred_fallthru
      _
    // Predicated region
    $region6: #{value_network_forward.1} parent=1 // pred_check
      _
    $region7: #{value_network_forward.1} parent=1 // pred_check_branch
      %26 = sbr.rel (0) target = $region9
    $region8: #{value_network_forward.1} parent=1 // pred_region
      %s28 = ssub.s32 256, 256
      %29 = vsyncadd [#allocation7], %s28
      %s30 = sshll.u32 [#allocation6], 4
      %s31 = int_to_ptr.vmem [resolvable:$true] %s30
      %36 = dma.hbm_to_vmem [thread:$0]  %s1, 256, %s31, [#allocation7], 64, 64, 4
    $region9: #{value_network_forward.1} parent=1 // pred_fallthru
      _
    // Predicated region
    $region10: #{value_network_forward.1} parent=1 // pred_check
      _
    $region11: #{value_network_forward.1} parent=1 // pred_check_branch
      %38 = sbr.rel (0) target = $region13
    $region12: #{value_network_forward.1} parent=1 // pred_region
      _
    $region13: #{value_network_forward.1} parent=1 // pred_fallthru
      _
    // Predicated region
    $region14: #{value_network_forward.1} parent=1 // pred_check
      _
    $region15: #{value_network_forward.1} parent=1 // pred_check_branch
      %40 = sbr.rel (0) target = $region17
    $region16: #{value_network_forward.1} parent=1 // pred_region
      _
    $region17: #{value_network_forward.1} parent=1 // pred_fallthru
      _
    // Predicated region
    $region18: #{value_network_forward.1} parent=1 // pred_check
      _
    $region19: #{value_network_forward.1} parent=1 // pred_check_branch
      %42 = sbr.rel (0) target = $region21
    $region20: #{value_network_forward.1} parent=1 // pred_region
      _
    $region21: #{value_network_forward.1} parent=1 // pred_fallthru
      _
    // Predicated region
    $region22: #{value_network_forward.1} parent=1 // pred_check
      _
    $region23: #{value_network_forward.1} parent=1 // pred_check_branch
      %44 = sbr.rel (0) target = $region25
    $region24: #{value_network_forward.1} parent=1 // pred_region
      %45 = dma.done [#allocation4], 128
    $region25: #{value_network_forward.1} parent=1 // pred_fallthru
      _
    // Predicated region
    $region26: #{value_network_forward.1} parent=1 // pred_check
      _
    $region27: #{value_network_forward.1} parent=1 // pred_check_branch
      %47 = sbr.rel (0) target = $region29
    $region28: #{value_network_forward.1} parent=1 // pred_region
      %48 = dma.done [#allocation7], 256
    $region29: #{value_network_forward.1} parent=1 // pred_fallthru
      _
    %v50 = vld [vmem:[#allocation3] sm:$0xff]
    %v51 = vpack.c.bf16 %v50, %v50
    %v52 = vld [vmem:[#allocation6] sm:$0xf]
    %v53 = vld [vmem:[#allocation6 + $0x4] sm:$0xf]
    %v54 = vld [vmem:[#allocation6 + $0x8] sm:$0xf]
    %v55 = vld [vmem:[#allocation6 + $0xc] sm:$0xf]
    %v56 = vld [vmem:[%s2] sm:$0x1]
    %v58 = vlaneseq
    %v59 = vshrl.u32 %v58, 7
    %v60 = vsub.s32 0, %v59
    %v61 = vrot.slane %v56, %v60
    %v67 = vunpack.c.l.b16 %v52
    %v68 = vunpack.c.l.b16 %v53
    %v69 = vunpack.c.l.b16 %v54
    %v70 = vunpack.c.l.b16 %v55
    %v71 = vpack.c.b16 %v68, %v67
    %v72 = vpack.c.b16 %v70, %v69
    %vm75 = vcmask 261120
    %v77 = vsel %vm75, %v51, 0
    %79 = vmatprep.subr.bf16.mxu0 0
    %80 = vmatpush1.bf16.msra.mxu0 0
    %81 = vmatprep.subr.bf16.mxu0 0
    %82 = vmatpush1.bf16.msra.mxu0 0
    %83 = vmatprep.subr.bf16.mxu0 0
    %84 = vmatpush1.bf16.msra.mxu0 0
    %85 = vmatprep.subr.bf16.mxu0 0
    %86 = vmatpush1.bf16.msra.mxu0 0
    %87 = vmatprep.subr.bf16.mxu0 0
    %88 = vmatpush1.bf16.msra.mxu0 0
    %89 = vmatprep.subr.bf16.mxu0 0
    %90 = vmatpush1.bf16.msra.mxu0 0
    %91 = vmatprep.subr.bf16.mxu0 0
    %92 = vmatpush1.bf16.msra.mxu0 %v72
    %93 = vmatprep.subr.bf16.mxu0 0
    %94 = vmatpush1.bf16.msra.mxu0 %v71
    %95 = vmatprep.subr.bf16.mxu0 0
    %96 = vmatpush2.bf16.msra.mxu0 0
    %97 = vmatprep.subr.bf16.mxu0 0
    %98 = vmatpush2.bf16.msra.mxu0 0
    %99 = vmatprep.subr.bf16.mxu0 0
    %100 = vmatpush2.bf16.msra.mxu0 0
    %101 = vmatprep.subr.bf16.mxu0 0
    %102 = vmatpush2.bf16.msra.mxu0 0
    %103 = vmatprep.subr.bf16.mxu0 0
    %104 = vmatpush2.bf16.msra.mxu0 0
    %105 = vmatprep.subr.bf16.mxu0 0
    %106 = vmatpush2.bf16.msra.mxu0 0
    %107 = vmatprep.subr.bf16.mxu0 0
    %108 = vmatpush2.bf16.msra.mxu0 0
    %109 = vmatprep.subr.bf16.mxu0 0
    %110 = vmatpush2.bf16.msra.mxu0 0
    %111 = vmatprep.mubr.bf16.mxu0 0
    %112 = vmatmul.mubr.bf16.gmra.mxu0 %v77
    %v113 = vpop.f32.mrf.mxu0
    %v114 = vadd.f32 %v61, %v113
    %v115 = vpop.f32.mrf.mxu0
    %v116 = vpop.f32.mrf.mxu0
    %v117 = vpop.f32.mrf.mxu0
    %118 = vdwg.mxu0
    %v119 = vmax.f32 %v114, 0.0
    %v120 = vld [vmem:[%s3] sm:$0x1]
    %v122 = vlaneseq
    %v123 = vshrl.u32 %v122, 7
    %v124 = vsub.s32 0, %v123
    %v125 = vrot.slane %v120, %v124
    %v127 = vmul.f32 %v119, %v125
    %v128 = vsel %vm75, %v127, 0.0
    %129 = vadd.xlane.f32.xlu0 %v128
    %v130 = vpop.xlane.xlu0 %129
    %v131 = vld [vmem:[#allocation2] sm:$0x1]
    %133 = vset.pattern.permute.xlu0 0
    %134 = vperm.xlu0 %133, %v131
    %v135 = vpop.permute.xlu0 %134
    %v137 = vlaneseq
    %v138 = vshrl.u32 %v137, 7
    %v139 = vsub.s32 0, %v138
    %v140 = vrot.slane %v135, %v139
    %v141 = vadd.f32 %v130, %v140
    %v143 = vlaneseq
    %v144 = vand.u32 %v143, 127
    %v145 = vlaneseq
    %v146 = vshrl.u32 %v145, 7
    %v147 = vsub.s32 %v144, %v146
    %v148 = vrot.slane %v141, %v147
    %vm150 = vcmask 57344
    %151 = vst.msk [vmem:[#allocation8] sm:$0x1] %vm150, %v148
    // Predicated region
    $region30: #{value_network_forward.1} parent=1 // pred_check
      _
    $region31: #{value_network_forward.1} parent=1 // pred_check_branch
      %153 = sbr.rel (0) target = $region33
    $region32: #{value_network_forward.1} parent=1 // pred_region
      %s155 = ssub.s32 16, 16
      %156 = vsyncadd [#allocation5], %s155
      %s158 = sshll.u32 [#allocation8], 4
      %s159 = int_to_ptr.vmem [resolvable:$true] %s158
      %161 = dma.vmem_to_hbm [thread:$0]  %s159, 16, %s5, [#allocation5]
    $region33: #{value_network_forward.1} parent=1 // pred_fallthru
      _
    // Predicated region
    $region34: #{value_network_forward.1} parent=1 // pred_check
      _
    $region35: #{value_network_forward.1} parent=1 // pred_check_branch
      %163 = sbr.rel (0) target = $region37
    $region36: #{value_network_forward.1} parent=1 // pred_region
      %164 = dma.done [#allocation5], 16
    $region37: #{value_network_forward.1} parent=1 // pred_fallthru
      _
    %165 = vsyncpa [#allocation4], 1
    %166 = vsyncpa [#allocation7], 1
    %167 = vsyncpa [#allocation5], 1

</llo_original>
